<compile_context>
chip_gen: v5e
topology: v5e:2x2
jax: 0.10.0
libtpu: 0.0.40
codegen_flags: <defaults>
</compile_context>

<pallas_src>
import numpy as np
import jax
import jax.numpy as jnp
from jax import lax
from jax.experimental import pallas as pl
from jax.experimental.pallas import tpu as pltpu

# ---------------- config (small, consistent with the module) ----------------
BATCH = 2
SEQ = 8
EMB_DIM = 32
N_HEADS = 4
N_KV_GROUPS = 2
HEAD_DIM = EMB_DIM // N_HEADS          # 8
GROUP_SIZE = N_HEADS // N_KV_GROUPS    # 2
KV_DIM = N_KV_GROUPS * HEAD_DIM        # 16
HIDDEN_DIM = 64                        # gated FF hidden dim
EPS = 1e-5
ROPE_BASE = 10000.0
NEG_BIAS = -1e30                       # finite "minus infinity" for the additive mask

# layout of the packed f32 slab (SLAB_ROWS x 128)
C_CQ = 0                               # cos tiled for Q  : cols [0, 32)
C_SQ = EMB_DIM                         # sin tiled for Q  : cols [32, 64)
C_CK = 2 * EMB_DIM                     # cos tiled for K  : cols [64, 80)
C_SK = 2 * EMB_DIM + KV_DIM            # sin tiled for K  : cols [80, 96)
C_BIAS = 2 * EMB_DIM + 2 * KV_DIM      # additive mask    : cols [96, 96+SEQ)
R_N1 = SEQ                             # row SEQ   : RMSNorm-1 weight (cols [0, 32))
R_N2 = SEQ + 1                         # row SEQ+1 : RMSNorm-2 weight (cols [0, 32))
SLAB_ROWS = 16                         # padded to a full sublane tile
assert C_BIAS + SEQ <= 128

# layout of the fused bf16 weight slabs
QKV_W = 128                            # [Wq | Wk | Wv | Wq@R | Wk@R | zero-pad] -> lane dense


def _rope(t, cos, sin):
    """Reference-only RoPE. t: (T, n, hd)  cos/sin: (T, hd)."""
    hd = t.shape[-1]
    t1 = t[..., : hd // 2]
    t2 = t[..., hd // 2:]
    rotated = jnp.concatenate([-t2, t1], axis=-1)
    out = (t.astype(jnp.float32) * cos[:, None, :]
           + rotated.astype(jnp.float32) * sin[:, None, :])
    return out.astype(t.dtype)


def _rmsnorm(x_bf16, w_f32):
    """RMSNorm in f32, output cast back to the input dtype (like the PyTorch ref)."""
    xf = x_bf16.astype(jnp.float32)
    ms = jnp.mean(xf * xf, axis=-1, keepdims=True)
    return (xf * lax.rsqrt(ms + EPS) * w_f32).astype(x_bf16.dtype)


# ------------------------------- Pallas kernel ------------------------------
def transformer_block_kernel(x_ref, fs_ref, wa_ref, wb_ref, o_ref):
    T, E, KVD, HD, HID = SEQ, EMB_DIM, KV_DIM, HEAD_DIM, HIDDEN_DIM

    x = x_ref[...]                                     # (T, E) bf16, one batch

    # ---- unpack the f32 slab (single DMA carries rope tables, bias and norm weights) ----
    cos_q = fs_ref[0:T, C_CQ:C_CQ + E]                 # (T, E)
    sin_q = fs_ref[0:T, C_SQ:C_SQ + E]
    cos_k = fs_ref[0:T, C_CK:C_CK + KVD]               # (T, KVD)
    sin_k = fs_ref[0:T, C_SK:C_SK + KVD]
    bias = fs_ref[0:T, C_BIAS:C_BIAS + T]              # (T, T) additive causal mask
    n1w = fs_ref[R_N1:R_N1 + 1, 0:E]                   # (1, E)
    n2w = fs_ref[R_N2:R_N2 + 1, 0:E]

    # ---- norm1 + fused QKV (+ folded rotate-half) projection, lane-dense 128 output ----
    xn = _rmsnorm(x, n1w)                              # (T, E) bf16
    qkv = jnp.dot(xn, wa_ref[:, 0:QKV_W],
                  preferred_element_type=jnp.float32)  # (T, 128) f32
    q_base = qkv[:, 0:E]
    k_base = qkv[:, E:E + KVD]
    v_f32 = qkv[:, E + KVD:E + 2 * KVD]
    q_rot = qkv[:, E + 2 * KVD:2 * E + 2 * KVD]
    k_rot = qkv[:, 2 * E + 2 * KVD:2 * E + 3 * KVD]    # cols 112:128 are zero padding

    # ---- RoPE as pure 2-D VPU elementwise math (rotate-half folded into weights) ----
    q = (q_base * cos_q + q_rot * sin_q).astype(jnp.bfloat16)   # (T, E)
    k = (k_base * cos_k + k_rot * sin_k).astype(jnp.bfloat16)   # (T, KVD)
    v = v_f32.astype(jnp.bfloat16)                               # (T, KVD)

    # ---- grouped-query attention: groups outer (slice K/V once), heads inner ----
    scale = 1.0 / float(HD) ** 0.5
    dn = (((1,), (1,)), ((), ()))                      # contract last dims: q @ k^T, no transpose
    ctx_parts = []
    for g in range(N_KV_GROUPS):
        kh = k[:, g * HD:(g + 1) * HD]                 # (T, HD)
        vh = v[:, g * HD:(g + 1) * HD]
        for hh in range(GROUP_SIZE):
            h = g * GROUP_SIZE + hh                    # head order 0..3 preserved
            qh = q[:, h * HD:(h + 1) * HD]
            s = lax.dot_general(qh, kh, dn, preferred_element_type=jnp.float32)
            s = s * scale + bias                       # hoisted additive mask
            m = jnp.max(s, axis=-1, keepdims=True)
            p = jnp.exp(s - m)
            denom = jnp.sum(p, axis=-1, keepdims=True)
            pw = (p * pl.reciprocal(denom)).astype(jnp.bfloat16)   # exact reciprocal
            ctx_parts.append(jnp.dot(pw, vh, preferred_element_type=jnp.float32))
    # one lane-concatenated context -> ONE (T,E)x(E,E) output projection
    ctx = jnp.concatenate(ctx_parts, axis=-1).astype(jnp.bfloat16)   # (T, E)
    attn = jnp.dot(ctx, wb_ref[0:E, :], preferred_element_type=jnp.float32)

    h1 = x + attn.astype(jnp.bfloat16)                 # residual 1

    # ---- norm2 + gated SwiGLU feed-forward (fused W1|W2, lane-dense 128-wide) ----
    h1n = _rmsnorm(h1, n2w)
    ab = jnp.dot(h1n, wa_ref[:, QKV_W:QKV_W + 2 * HID],
                 preferred_element_type=jnp.float32)   # (T, 128)
    a = ab[:, :HID]
    b = ab[:, HID:]
    gated = (jax.nn.silu(a) * b).astype(jnp.bfloat16)
    ff = jnp.dot(gated, wb_ref[E:E + HID, :], preferred_element_type=jnp.float32)

    o_ref[...] = h1 + ff.astype(jnp.bfloat16)          # residual 2


# ------------------- one-time (weight-load time) parameter prep -------------------
def _fold_rotate_half(w, n_blocks):
    """Columns of w permuted/negated so xn @ w_rot == rotate_half(xn @ w) per head block.
    Exact in bf16 (signed column permutation, no arithmetic)."""
    e = w.shape[0]
    wr = w.reshape(e, n_blocks, HEAD_DIM)
    first = wr[..., :HEAD_DIM // 2]
    second = wr[..., HEAD_DIM // 2:]
    return jnp.concatenate([-second, first], axis=-1).reshape(e, n_blocks * HEAD_DIM)


def prepare_block_params(mask, cos, sin, n1w, wq, wk, wv, wo, n2w, w1, w2, w3):
    """All weight-/mask-static prep, hoisted out of the per-call path (run once)."""
    E, KVD, T, HID = EMB_DIM, KV_DIM, SEQ, HIDDEN_DIM

    # fused bf16 up-projection slab: [Wq | Wk | Wv | Wq@R | Wk@R | pad] | [W1 | W2]
    wq_rot = _fold_rotate_half(wq, N_HEADS)
    wk_rot = _fold_rotate_half(wk, N_KV_GROUPS)
    w_qkv = jnp.concatenate([wq, wk, wv, wq_rot, wk_rot], axis=1)        # (E, 112)
    w_qkv = jnp.concatenate(
        [w_qkv, jnp.zeros((E, QKV_W - w_qkv.shape[1]), w_qkv.dtype)], axis=1)  # (E, 128)
    w12 = jnp.concatenate([w1, w2], axis=1)                              # (E, 128)
    w_a = jnp.concatenate([w_qkv, w12], axis=1)                          # (E, 256) bf16

    # fused bf16 down-projection slab: [Wo ; W3]
    w_b = jnp.concatenate([wo, w3], axis=0)                              # (E+HID, E) bf16

    # f32 slab: rope tables in packed 2-D layout, additive mask, RMSNorm weights
    cos_q = jnp.tile(cos.astype(jnp.float32), (1, N_HEADS))              # (T, E)
    sin_q = jnp.tile(sin.astype(jnp.float32), (1, N_HEADS))
    cos_k = jnp.tile(cos.astype(jnp.float32), (1, N_KV_GROUPS))          # (T, KVD)
    sin_k = jnp.tile(sin.astype(jnp.float32), (1, N_KV_GROUPS))
    bias = jnp.where(mask != 0, jnp.float32(NEG_BIAS), jnp.float32(0.0))  # (T, T)
    rope_rows = jnp.concatenate([cos_q, sin_q, cos_k, sin_k, bias], axis=1)
    rope_rows = jnp.pad(rope_rows, ((0, 0), (0, 128 - rope_rows.shape[1])))
    norm_rows = jnp.pad(
        jnp.concatenate([n1w, n2w], axis=0).astype(jnp.float32),
        ((0, 0), (0, 128 - E)))                                          # (2, 128)
    fslab = jnp.concatenate([rope_rows, norm_rows], axis=0)              # (T+2, 128)
    fslab = jnp.pad(fslab, ((0, SLAB_ROWS - fslab.shape[0]), (0, 0)))    # (16, 128) f32
    return fslab, w_a, w_b


# ------------------------------ per-call wrapper ------------------------------
@jax.jit
def transformer_block(x, fslab, w_a, w_b):
    B, T, E = x.shape
    x2 = x.reshape(B * T, E)

    out2 = pl.pallas_call(
        transformer_block_kernel,
        out_shape=jax.ShapeDtypeStruct((B * T, E), jnp.bfloat16),
        grid=(B,),
        in_specs=[
            pl.BlockSpec((T, E), lambda b: (b, 0)),                  # per-batch activations
            pl.BlockSpec((SLAB_ROWS, 128), lambda b: (0, 0)),        # f32 slab (resident)
            pl.BlockSpec((E, QKV_W + 2 * HIDDEN_DIM), lambda b: (0, 0)),   # bf16 up-proj slab
            pl.BlockSpec((E + HIDDEN_DIM, E), lambda b: (0, 0)),     # bf16 down-proj slab
        ],
        out_specs=pl.BlockSpec((T, E), lambda b: (b, 0)),
        compiler_params=pltpu.CompilerParams(
            dimension_semantics=("parallel",)),                      # shards over v7x's 2 TCs
    )(x2, fslab, w_a, w_b)
    return out2.reshape(B, T, E)


# ---------------------------- pure-JAX reference -----------------------------
def reference_block(x, mask, cos, sin, n1w, wq, wk, wv, wo, n2w, w1, w2, w3):
    def one(xb):
        xn = _rmsnorm(xb, n1w[0])
        q = (xn.astype(jnp.float32) @ wq.astype(jnp.float32)).astype(jnp.bfloat16)
        k = (xn.astype(jnp.float32) @ wk.astype(jnp.float32)).astype(jnp.bfloat16)
        v = (xn.astype(jnp.float32) @ wv.astype(jnp.float32)).astype(jnp.bfloat16)
        T = xb.shape[0]
        q = _rope(q.reshape(T, N_HEADS, HEAD_DIM), cos, sin)
        k = _rope(k.reshape(T, N_KV_GROUPS, HEAD_DIM), cos, sin)
        v = v.reshape(T, N_KV_GROUPS, HEAD_DIM)
        scale = 1.0 / float(HEAD_DIM) ** 0.5
        ctxs = []
        for h in range(N_HEADS):
            g = h // GROUP_SIZE
            s = (q[:, h, :].astype(jnp.float32) @ k[:, g, :].astype(jnp.float32).T) * scale
            s = jnp.where(mask != 0, -jnp.inf, s)
            w = jax.nn.softmax(s, axis=-1).astype(jnp.bfloat16)
            ctxs.append((w.astype(jnp.float32) @ v[:, g, :].astype(jnp.float32)).astype(jnp.bfloat16))
        ctx = jnp.concatenate(ctxs, axis=-1)
        attn = (ctx.astype(jnp.float32) @ wo.astype(jnp.float32)).astype(jnp.bfloat16)
        h1 = xb + attn
        h1n = _rmsnorm(h1, n2w[0])
        a = h1n.astype(jnp.float32) @ w1.astype(jnp.float32)
        b = h1n.astype(jnp.float32) @ w2.astype(jnp.float32)
        gated = (jax.nn.silu(a) * b).astype(jnp.bfloat16)
        ff = (gated.astype(jnp.float32) @ w3.astype(jnp.float32)).astype(jnp.bfloat16)
        return h1 + ff
    return jnp.stack([one(x[i]) for i in range(x.shape[0])], axis=0)


# ----------------------------------- main ------------------------------------
if __name__ == "__main__":
    key = jax.random.PRNGKey(0)
    keys = jax.random.split(key, 10)

    # deterministic synthetic parameters (shapes from the module's __init__)
    scale = 0.05
    x = jax.random.normal(keys[0], (BATCH, SEQ, EMB_DIM), jnp.float32).astype(jnp.bfloat16)
    wq = (scale * jax.random.normal(keys[1], (EMB_DIM, EMB_DIM), jnp.float32)).astype(jnp.bfloat16)
    wk = (scale * jax.random.normal(keys[2], (EMB_DIM, KV_DIM), jnp.float32)).astype(jnp.bfloat16)
    wv = (scale * jax.random.normal(keys[3], (EMB_DIM, KV_DIM), jnp.float32)).astype(jnp.bfloat16)
    wo = (scale * jax.random.normal(keys[4], (EMB_DIM, EMB_DIM), jnp.float32)).astype(jnp.bfloat16)
    w1 = (scale * jax.random.normal(keys[5], (EMB_DIM, HIDDEN_DIM), jnp.float32)).astype(jnp.bfloat16)
    w2 = (scale * jax.random.normal(keys[6], (EMB_DIM, HIDDEN_DIM), jnp.float32)).astype(jnp.bfloat16)
    w3 = (scale * jax.random.normal(keys[7], (HIDDEN_DIM, EMB_DIM), jnp.float32)).astype(jnp.bfloat16)
    # RMSNorm weights (float32, init to ones like nn.Parameter(torch.ones(...)))
    n1w = jnp.ones((1, EMB_DIM), jnp.float32)
    n2w = jnp.ones((1, EMB_DIM), jnp.float32)

    # RoPE tables (Llama style: halves duplicated along the head dim)
    inv_freq = 1.0 / (ROPE_BASE ** (jnp.arange(0, HEAD_DIM, 2, dtype=jnp.float32) / HEAD_DIM))
    angles = jnp.arange(SEQ, dtype=jnp.float32)[:, None] * inv_freq[None, :]   # (T, hd/2)
    angles = jnp.concatenate([angles, angles], axis=-1)                         # (T, hd)
    cos = jnp.cos(angles)
    sin = jnp.sin(angles)

    # causal mask: 1.0 where masked (j > i), matching masked_fill(bool_mask, -inf)
    mask = (jnp.arange(SEQ)[None, :] > jnp.arange(SEQ)[:, None]).astype(jnp.float32)

    # one-time (weight-load time) prep, hoisted out of the per-call path
    fslab, w_a, w_b = prepare_block_params(mask, cos, sin, n1w,
                                           wq, wk, wv, wo, n2w, w1, w2, w3)
    fslab, w_a, w_b = jax.block_until_ready((fslab, w_a, w_b))

    out = transformer_block(x, fslab, w_a, w_b)
    out = jax.block_until_ready(out)

    ref = reference_block(x, mask, cos, sin, n1w, wq, wk, wv, wo, n2w, w1, w2, w3)
    np.testing.assert_allclose(np.asarray(out, dtype=np.float32),
                               np.asarray(ref, dtype=np.float32),
                               atol=2.5e-1, rtol=1e-1)
    assert out.shape == (BATCH, SEQ, EMB_DIM) and out.dtype == jnp.bfloat16
    print("KERNEL_OK")
</pallas_src>

<mosaic_0001>
module attributes {stable_mosaic.version = 11 : i64} {
  func.func @transformer_block_kernel(%arg0: i32, %arg1: memref<8x32xbf16, #tpu.memory_space<vmem>>, %arg2: memref<16x128xf32, #tpu.memory_space<vmem>>, %arg3: memref<32x256xbf16, #tpu.memory_space<vmem>>, %arg4: memref<96x32xbf16, #tpu.memory_space<vmem>>, %arg5: memref<8x32xbf16, #tpu.memory_space<vmem>>) attributes {dimension_semantics = [#tpu.dimension_semantics<parallel>], iteration_bounds = array<i64: 2>, scalar_prefetch = 0 : i64, scratch_operands = 0 : i64, tpu.core_type = #tpu.core_type<tc>, window_params = [{transform_indices = @transform_0, window_bounds = array<i64: 8, 32>}, {pipeline_mode = #tpu.pipeline_mode<synchronous>, transform_indices = @transform_1, window_bounds = array<i64: 16, 128>}, {pipeline_mode = #tpu.pipeline_mode<synchronous>, transform_indices = @transform_2, window_bounds = array<i64: 32, 256>}, {pipeline_mode = #tpu.pipeline_mode<synchronous>, transform_indices = @transform_3, window_bounds = array<i64: 96, 32>}, {transform_indices = @transform_4, window_bounds = array<i64: 8, 32>}]} {
    %c0 = arith.constant 0 : index
    %c0_0 = arith.constant 0 : index
    %0 = vector.load %arg1[%c0, %c0_0] : memref<8x32xbf16, #tpu.memory_space<vmem>>, vector<8x32xbf16>
    %c0_1 = arith.constant 0 : index
    %c0_2 = arith.constant 0 : index
    %1 = vector.load %arg2[%c0_1, %c0_2] : memref<16x128xf32, #tpu.memory_space<vmem>>, vector<8x32xf32>
    %c0_3 = arith.constant 0 : index
    %c32 = arith.constant 32 : index
    %2 = vector.load %arg2[%c0_3, %c32] : memref<16x128xf32, #tpu.memory_space<vmem>>, vector<8x32xf32>
    %c0_4 = arith.constant 0 : index
    %c64 = arith.constant 64 : index
    %3 = vector.load %arg2[%c0_4, %c64] : memref<16x128xf32, #tpu.memory_space<vmem>>, vector<8x16xf32>
    %c0_5 = arith.constant 0 : index
    %c80 = arith.constant 80 : index
    %4 = vector.load %arg2[%c0_5, %c80] : memref<16x128xf32, #tpu.memory_space<vmem>>, vector<8x16xf32>
    %c0_6 = arith.constant 0 : index
    %c96 = arith.constant 96 : index
    %5 = vector.load %arg2[%c0_6, %c96] : memref<16x128xf32, #tpu.memory_space<vmem>>, vector<8x8xf32>
    %c8 = arith.constant 8 : index
    %c0_7 = arith.constant 0 : index
    %6 = vector.load %arg2[%c8, %c0_7] : memref<16x128xf32, #tpu.memory_space<vmem>>, vector<1x32xf32>
    %c9 = arith.constant 9 : index
    %c0_8 = arith.constant 0 : index
    %7 = vector.load %arg2[%c9, %c0_8] : memref<16x128xf32, #tpu.memory_space<vmem>>, vector<1x32xf32>
    %8 = arith.extf %0 : vector<8x32xbf16> to vector<8x32xf32>
    %9 = arith.mulf %8, %8 : vector<8x32xf32>
    %cst = arith.constant dense<0.000000e+00> : vector<8xf32>
    %10 = vector.multi_reduction <add>, %9, %cst [1] : vector<8x32xf32> to vector<8xf32>
    %11 = vector.shape_cast %10 : vector<8xf32> to vector<8x1xf32>
    %cst_9 = arith.constant 3.200000e+01 : f32
    %12 = vector.broadcast %cst_9 : f32 to vector<8x1xf32>
    %13 = arith.divf %11, %12 : vector<8x1xf32>
    %cst_10 = arith.constant 9.99999974E-6 : f32
    %14 = vector.broadcast %cst_10 : f32 to vector<8x1xf32>
    %15 = arith.addf %13, %14 : vector<8x1xf32>
    %16 = math.rsqrt %15 : vector<8x1xf32>
    %17 = vector.broadcast %16 : vector<8x1xf32> to vector<8x32xf32>
    %18 = arith.mulf %8, %17 : vector<8x32xf32>
    %19 = vector.broadcast %6 : vector<1x32xf32> to vector<8x32xf32>
    %20 = arith.mulf %18, %19 : vector<8x32xf32>
    %21 = arith.truncf %20 : vector<8x32xf32> to vector<8x32xbf16>
    %c0_11 = arith.constant 0 : index
    %c0_12 = arith.constant 0 : index
    %22 = vector.load %arg3[%c0_11, %c0_12] : memref<32x256xbf16, #tpu.memory_space<vmem>>, vector<32x128xbf16>
    %cst_13 = arith.constant dense<0.000000e+00> : vector<8x128xf32>
    %23 = tpu.matmul %21, %22, %cst_13 {dimension_numbers = #tpu.dot_dimension_numbers<[1], [0], [0], [1], [0, 0, 1, 1], [], []>} : vector<8x32xbf16>, vector<32x128xbf16>, vector<8x128xf32> -> vector<8x128xf32>
    %24 = vector.extract_strided_slice %23 {offsets = [0, 0], sizes = [8, 32], strides = [1, 1]} : vector<8x128xf32> to vector<8x32xf32>
    %25 = vector.extract_strided_slice %23 {offsets = [0, 32], sizes = [8, 16], strides = [1, 1]} : vector<8x128xf32> to vector<8x16xf32>
    %26 = vector.extract_strided_slice %23 {offsets = [0, 48], sizes = [8, 16], strides = [1, 1]} : vector<8x128xf32> to vector<8x16xf32>
    %27 = vector.extract_strided_slice %23 {offsets = [0, 64], sizes = [8, 32], strides = [1, 1]} : vector<8x128xf32> to vector<8x32xf32>
    %28 = vector.extract_strided_slice %23 {offsets = [0, 96], sizes = [8, 16], strides = [1, 1]} : vector<8x128xf32> to vector<8x16xf32>
    %29 = arith.mulf %24, %1 : vector<8x32xf32>
    %30 = arith.mulf %27, %2 : vector<8x32xf32>
    %31 = arith.addf %29, %30 : vector<8x32xf32>
    %32 = arith.truncf %31 : vector<8x32xf32> to vector<8x32xbf16>
    %33 = arith.mulf %25, %3 : vector<8x16xf32>
    %34 = arith.mulf %28, %4 : vector<8x16xf32>
    %35 = arith.addf %33, %34 : vector<8x16xf32>
    %36 = arith.truncf %35 : vector<8x16xf32> to vector<8x16xbf16>
    %37 = arith.truncf %26 : vector<8x16xf32> to vector<8x16xbf16>
    %38 = vector.extract_strided_slice %36 {offsets = [0, 0], sizes = [8, 8], strides = [1, 1]} : vector<8x16xbf16> to vector<8x8xbf16>
    %39 = vector.extract_strided_slice %37 {offsets = [0, 0], sizes = [8, 8], strides = [1, 1]} : vector<8x16xbf16> to vector<8x8xbf16>
    %40 = vector.extract_strided_slice %32 {offsets = [0, 0], sizes = [8, 8], strides = [1, 1]} : vector<8x32xbf16> to vector<8x8xbf16>
    %cst_14 = arith.constant dense<0.000000e+00> : vector<8x8xf32>
    %41 = tpu.matmul %40, %38, %cst_14 {dimension_numbers = #tpu.dot_dimension_numbers<[1], [1], [0], [0], [0, 0, 1, 0], [], []>} : vector<8x8xbf16>, vector<8x8xbf16>, vector<8x8xf32> -> vector<8x8xf32>
    %cst_15 = arith.constant 0.353553385 : f32
    %42 = vector.broadcast %cst_15 : f32 to vector<8x8xf32>
    %43 = arith.mulf %41, %42 : vector<8x8xf32>
    %44 = arith.addf %43, %5 : vector<8x8xf32>
    %cst_16 = arith.constant dense<0xFF800000> : vector<8xf32>
    %45 = vector.multi_reduction <maximumf>, %44, %cst_16 [1] : vector<8x8xf32> to vector<8xf32>
    %46 = vector.shape_cast %45 : vector<8xf32> to vector<8x1xf32>
    %47 = vector.broadcast %46 : vector<8x1xf32> to vector<8x8xf32>
    %48 = arith.subf %44, %47 : vector<8x8xf32>
    %49 = math.exp %48 : vector<8x8xf32>
    %cst_17 = arith.constant dense<0.000000e+00> : vector<8xf32>
    %50 = vector.multi_reduction <add>, %49, %cst_17 [1] : vector<8x8xf32> to vector<8xf32>
    %51 = vector.shape_cast %50 : vector<8xf32> to vector<8x1xf32>
    %52 = tpu.reciprocal %51 : vector<8x1xf32> -> vector<8x1xf32>
    %53 = vector.broadcast %52 : vector<8x1xf32> to vector<8x8xf32>
    %54 = arith.mulf %49, %53 : vector<8x8xf32>
    %55 = arith.truncf %54 : vector<8x8xf32> to vector<8x8xbf16>
    %cst_18 = arith.constant dense<0.000000e+00> : vector<8x8xf32>
    %56 = tpu.matmul %55, %39, %cst_18 {dimension_numbers = #tpu.dot_dimension_numbers<[1], [0], [0], [1], [0, 0, 1, 1], [], []>} : vector<8x8xbf16>, vector<8x8xbf16>, vector<8x8xf32> -> vector<8x8xf32>
    %57 = vector.extract_strided_slice %32 {offsets = [0, 8], sizes = [8, 8], strides = [1, 1]} : vector<8x32xbf16> to vector<8x8xbf16>
    %cst_19 = arith.constant dense<0.000000e+00> : vector<8x8xf32>
    %58 = tpu.matmul %57, %38, %cst_19 {dimension_numbers = #tpu.dot_dimension_numbers<[1], [1], [0], [0], [0, 0, 1, 0], [], []>} : vector<8x8xbf16>, vector<8x8xbf16>, vector<8x8xf32> -> vector<8x8xf32>
    %cst_20 = arith.constant 0.353553385 : f32
    %59 = vector.broadcast %cst_20 : f32 to vector<8x8xf32>
    %60 = arith.mulf %58, %59 : vector<8x8xf32>
    %61 = arith.addf %60, %5 : vector<8x8xf32>
    %cst_21 = arith.constant dense<0xFF800000> : vector<8xf32>
    %62 = vector.multi_reduction <maximumf>, %61, %cst_21 [1] : vector<8x8xf32> to vector<8xf32>
    %63 = vector.shape_cast %62 : vector<8xf32> to vector<8x1xf32>
    %64 = vector.broadcast %63 : vector<8x1xf32> to vector<8x8xf32>
    %65 = arith.subf %61, %64 : vector<8x8xf32>
    %66 = math.exp %65 : vector<8x8xf32>
    %cst_22 = arith.constant dense<0.000000e+00> : vector<8xf32>
    %67 = vector.multi_reduction <add>, %66, %cst_22 [1] : vector<8x8xf32> to vector<8xf32>
    %68 = vector.shape_cast %67 : vector<8xf32> to vector<8x1xf32>
    %69 = tpu.reciprocal %68 : vector<8x1xf32> -> vector<8x1xf32>
    %70 = vector.broadcast %69 : vector<8x1xf32> to vector<8x8xf32>
    %71 = arith.mulf %66, %70 : vector<8x8xf32>
    %72 = arith.truncf %71 : vector<8x8xf32> to vector<8x8xbf16>
    %cst_23 = arith.constant dense<0.000000e+00> : vector<8x8xf32>
    %73 = tpu.matmul %72, %39, %cst_23 {dimension_numbers = #tpu.dot_dimension_numbers<[1], [0], [0], [1], [0, 0, 1, 1], [], []>} : vector<8x8xbf16>, vector<8x8xbf16>, vector<8x8xf32> -> vector<8x8xf32>
    %74 = vector.extract_strided_slice %36 {offsets = [0, 8], sizes = [8, 8], strides = [1, 1]} : vector<8x16xbf16> to vector<8x8xbf16>
    %75 = vector.extract_strided_slice %37 {offsets = [0, 8], sizes = [8, 8], strides = [1, 1]} : vector<8x16xbf16> to vector<8x8xbf16>
    %76 = vector.extract_strided_slice %32 {offsets = [0, 16], sizes = [8, 8], strides = [1, 1]} : vector<8x32xbf16> to vector<8x8xbf16>
    %cst_24 = arith.constant dense<0.000000e+00> : vector<8x8xf32>
    %77 = tpu.matmul %76, %74, %cst_24 {dimension_numbers = #tpu.dot_dimension_numbers<[1], [1], [0], [0], [0, 0, 1, 0], [], []>} : vector<8x8xbf16>, vector<8x8xbf16>, vector<8x8xf32> -> vector<8x8xf32>
    %cst_25 = arith.constant 0.353553385 : f32
    %78 = vector.broadcast %cst_25 : f32 to vector<8x8xf32>
    %79 = arith.mulf %77, %78 : vector<8x8xf32>
    %80 = arith.addf %79, %5 : vector<8x8xf32>
    %cst_26 = arith.constant dense<0xFF800000> : vector<8xf32>
    %81 = vector.multi_reduction <maximumf>, %80, %cst_26 [1] : vector<8x8xf32> to vector<8xf32>
    %82 = vector.shape_cast %81 : vector<8xf32> to vector<8x1xf32>
    %83 = vector.broadcast %82 : vector<8x1xf32> to vector<8x8xf32>
    %84 = arith.subf %80, %83 : vector<8x8xf32>
    %85 = math.exp %84 : vector<8x8xf32>
    %cst_27 = arith.constant dense<0.000000e+00> : vector<8xf32>
    %86 = vector.multi_reduction <add>, %85, %cst_27 [1] : vector<8x8xf32> to vector<8xf32>
    %87 = vector.shape_cast %86 : vector<8xf32> to vector<8x1xf32>
    %88 = tpu.reciprocal %87 : vector<8x1xf32> -> vector<8x1xf32>
    %89 = vector.broadcast %88 : vector<8x1xf32> to vector<8x8xf32>
    %90 = arith.mulf %85, %89 : vector<8x8xf32>
    %91 = arith.truncf %90 : vector<8x8xf32> to vector<8x8xbf16>
    %cst_28 = arith.constant dense<0.000000e+00> : vector<8x8xf32>
    %92 = tpu.matmul %91, %75, %cst_28 {dimension_numbers = #tpu.dot_dimension_numbers<[1], [0], [0], [1], [0, 0, 1, 1], [], []>} : vector<8x8xbf16>, vector<8x8xbf16>, vector<8x8xf32> -> vector<8x8xf32>
    %93 = vector.extract_strided_slice %32 {offsets = [0, 24], sizes = [8, 8], strides = [1, 1]} : vector<8x32xbf16> to vector<8x8xbf16>
    %cst_29 = arith.constant dense<0.000000e+00> : vector<8x8xf32>
    %94 = tpu.matmul %93, %74, %cst_29 {dimension_numbers = #tpu.dot_dimension_numbers<[1], [1], [0], [0], [0, 0, 1, 0], [], []>} : vector<8x8xbf16>, vector<8x8xbf16>, vector<8x8xf32> -> vector<8x8xf32>
    %cst_30 = arith.constant 0.353553385 : f32
    %95 = vector.broadcast %cst_30 : f32 to vector<8x8xf32>
    %96 = arith.mulf %94, %95 : vector<8x8xf32>
    %97 = arith.addf %96, %5 : vector<8x8xf32>
    %cst_31 = arith.constant dense<0xFF800000> : vector<8xf32>
    %98 = vector.multi_reduction <maximumf>, %97, %cst_31 [1] : vector<8x8xf32> to vector<8xf32>
    %99 = vector.shape_cast %98 : vector<8xf32> to vector<8x1xf32>
    %100 = vector.broadcast %99 : vector<8x1xf32> to vector<8x8xf32>
    %101 = arith.subf %97, %100 : vector<8x8xf32>
    %102 = math.exp %101 : vector<8x8xf32>
    %cst_32 = arith.constant dense<0.000000e+00> : vector<8xf32>
    %103 = vector.multi_reduction <add>, %102, %cst_32 [1] : vector<8x8xf32> to vector<8xf32>
    %104 = vector.shape_cast %103 : vector<8xf32> to vector<8x1xf32>
    %105 = tpu.reciprocal %104 : vector<8x1xf32> -> vector<8x1xf32>
    %106 = vector.broadcast %105 : vector<8x1xf32> to vector<8x8xf32>
    %107 = arith.mulf %102, %106 : vector<8x8xf32>
    %108 = arith.truncf %107 : vector<8x8xf32> to vector<8x8xbf16>
    %cst_33 = arith.constant dense<0.000000e+00> : vector<8x8xf32>
    %109 = tpu.matmul %108, %75, %cst_33 {dimension_numbers = #tpu.dot_dimension_numbers<[1], [0], [0], [1], [0, 0, 1, 1], [], []>} : vector<8x8xbf16>, vector<8x8xbf16>, vector<8x8xf32> -> vector<8x8xf32>
    %110 = tpu.concatenate %56, %73, %92, %109 in 1 : vector<8x8xf32>, vector<8x8xf32>, vector<8x8xf32>, vector<8x8xf32> -> vector<8x32xf32>
    %111 = arith.truncf %110 : vector<8x32xf32> to vector<8x32xbf16>
    %c0_34 = arith.constant 0 : index
    %c0_35 = arith.constant 0 : index
    %112 = vector.load %arg4[%c0_34, %c0_35] : memref<96x32xbf16, #tpu.memory_space<vmem>>, vector<32x32xbf16>
    %cst_36 = arith.constant dense<0.000000e+00> : vector<8x32xf32>
    %113 = tpu.matmul %111, %112, %cst_36 {dimension_numbers = #tpu.dot_dimension_numbers<[1], [0], [0], [1], [0, 0, 1, 1], [], []>} : vector<8x32xbf16>, vector<32x32xbf16>, vector<8x32xf32> -> vector<8x32xf32>
    %114 = arith.truncf %113 : vector<8x32xf32> to vector<8x32xbf16>
    %115 = arith.addf %0, %114 : vector<8x32xbf16>
    %116 = arith.extf %115 : vector<8x32xbf16> to vector<8x32xf32>
    %117 = arith.mulf %116, %116 : vector<8x32xf32>
    %cst_37 = arith.constant dense<0.000000e+00> : vector<8xf32>
    %118 = vector.multi_reduction <add>, %117, %cst_37 [1] : vector<8x32xf32> to vector<8xf32>
    %119 = vector.shape_cast %118 : vector<8xf32> to vector<8x1xf32>
    %cst_38 = arith.constant 3.200000e+01 : f32
    %120 = vector.broadcast %cst_38 : f32 to vector<8x1xf32>
    %121 = arith.divf %119, %120 : vector<8x1xf32>
    %cst_39 = arith.constant 9.99999974E-6 : f32
    %122 = vector.broadcast %cst_39 : f32 to vector<8x1xf32>
    %123 = arith.addf %121, %122 : vector<8x1xf32>
    %124 = math.rsqrt %123 : vector<8x1xf32>
    %125 = vector.broadcast %124 : vector<8x1xf32> to vector<8x32xf32>
    %126 = arith.mulf %116, %125 : vector<8x32xf32>
    %127 = vector.broadcast %7 : vector<1x32xf32> to vector<8x32xf32>
    %128 = arith.mulf %126, %127 : vector<8x32xf32>
    %129 = arith.truncf %128 : vector<8x32xf32> to vector<8x32xbf16>
    %c0_40 = arith.constant 0 : index
    %c128 = arith.constant 128 : index
    %130 = vector.load %arg3[%c0_40, %c128] : memref<32x256xbf16, #tpu.memory_space<vmem>>, vector<32x128xbf16>
    %cst_41 = arith.constant dense<0.000000e+00> : vector<8x128xf32>
    %131 = tpu.matmul %129, %130, %cst_41 {dimension_numbers = #tpu.dot_dimension_numbers<[1], [0], [0], [1], [0, 0, 1, 1], [], []>} : vector<8x32xbf16>, vector<32x128xbf16>, vector<8x128xf32> -> vector<8x128xf32>
    %132 = vector.extract_strided_slice %131 {offsets = [0, 0], sizes = [8, 64], strides = [1, 1]} : vector<8x128xf32> to vector<8x64xf32>
    %133 = vector.extract_strided_slice %131 {offsets = [0, 64], sizes = [8, 64], strides = [1, 1]} : vector<8x128xf32> to vector<8x64xf32>
    %134 = arith.negf %132 : vector<8x64xf32>
    %135 = math.exp %134 : vector<8x64xf32>
    %cst_42 = arith.constant 1.000000e+00 : f32
    %136 = vector.broadcast %cst_42 : f32 to vector<8x64xf32>
    %137 = arith.addf %136, %135 : vector<8x64xf32>
    %138 = arith.divf %136, %137 : vector<8x64xf32>
    %139 = arith.mulf %132, %138 : vector<8x64xf32>
    %140 = arith.mulf %139, %133 : vector<8x64xf32>
    %141 = arith.truncf %140 : vector<8x64xf32> to vector<8x64xbf16>
    %c32_43 = arith.constant 32 : index
    %c0_44 = arith.constant 0 : index
    %142 = vector.load %arg4[%c32_43, %c0_44] : memref<96x32xbf16, #tpu.memory_space<vmem>>, vector<64x32xbf16>
    %cst_45 = arith.constant dense<0.000000e+00> : vector<8x32xf32>
    %143 = tpu.matmul %141, %142, %cst_45 {dimension_numbers = #tpu.dot_dimension_numbers<[1], [0], [0], [1], [0, 0, 1, 1], [], []>} : vector<8x64xbf16>, vector<64x32xbf16>, vector<8x32xf32> -> vector<8x32xf32>
    %144 = arith.truncf %143 : vector<8x32xf32> to vector<8x32xbf16>
    %145 = arith.addf %115, %144 : vector<8x32xbf16>
    %c0_46 = arith.constant 0 : index
    %c0_47 = arith.constant 0 : index
    %146 = vector.load %arg5[%c0_46, %c0_47] : memref<8x32xbf16, #tpu.memory_space<vmem>>, vector<8x32xbf16>
    tpu.vector_store %arg5[%c0_46, %c0_47], %145 {strides = array<i32>} : memref<8x32xbf16, #tpu.memory_space<vmem>>, vector<8x32xbf16>,
    return
  }
  func.func @transform_0(%arg0: i32) -> (i32, i32) {
    %c0_i32 = arith.constant 0 : i32
    %c0_i32_0 = arith.constant 0 : i32
    return %arg0, %c0_i32 : i32, i32
  }
  func.func @transform_1(%arg0: i32) -> (i32, i32) {
    %c0_i32 = arith.constant 0 : i32
    %c0_i32_0 = arith.constant 0 : i32
    %c0_i32_1 = arith.constant 0 : i32
    return %c0_i32, %c0_i32_0 : i32, i32
  }
  func.func @transform_2(%arg0: i32) -> (i32, i32) {
    %c0_i32 = arith.constant 0 : i32
    %c0_i32_0 = arith.constant 0 : i32
    %c0_i32_1 = arith.constant 0 : i32
    return %c0_i32, %c0_i32_0 : i32, i32
  }
  func.func @transform_3(%arg0: i32) -> (i32, i32) {
    %c0_i32 = arith.constant 0 : i32
    %c0_i32_0 = arith.constant 0 : i32
    %c0_i32_1 = arith.constant 0 : i32
    return %c0_i32, %c0_i32_0 : i32, i32
  }
  func.func @transform_4(%arg0: i32) -> (i32, i32) {
    %c0_i32 = arith.constant 0 : i32
    %c0_i32_0 = arith.constant 0 : i32
    return %arg0, %c0_i32 : i32, i32
  }
}

</mosaic_0001>

<llo_original>
// kernel: transformer_block.1
$region0: #{transformer_block.1}
  #allocation0 [shape = 'u32[]', space=smem, size = 0x4, offset = 0x4, fixed_abs, tag = 'smem constant byte address 0x4 - core index']
  #allocation1 [shape = 'u32[72,128]{1,0:T(1,128)}', space=vmem, size = 0x9000, scoped, tag = 'internal scratch']
  %s0 = inlined_call_operand.vmem [shape: bf16[16,32], index: 0, kind: input, shape index: {}]
  %s1 = inlined_call_operand.vmem [shape: f32[16,128], index: 1, kind: input, shape index: {}]
  %s2 = inlined_call_operand.vmem [shape: bf16[32,256], index: 2, kind: input, shape index: {}]
  %s3 = inlined_call_operand.vmem [shape: bf16[96,32], index: 3, kind: input, shape index: {}]
  %s4 = inlined_call_operand.hbm [shape: bf16[16,32], index: 4, kind: output, shape index: {}]
  %s5 = sld [smem:[#allocation0]]
  $region49: #{transformer_block.1} parent=0
    _
  %s7 = ssub.s32 1, %s5
  %s8 = scalar_select 0, %s7, %s5
  $region1: #{transformer_block.1} parent=0
    #allocation2 [shape = 'u8[4096]{0}', space=vmem, size = 0x1000, scoped, tag = 'output window, operand 0']
    #allocation3 [shape = 's32[2]{0}', space=sflag, size = 0x8, scoped, tag = 'scoped memory for transformer_block.1']
    %9 = vsyncpa [#allocation3], 0
    %s10 = scalar_lea.sflag [#allocation3], 1
    %11 = vsyncpa %s10, 0
    loop: start=0, step=1, limit=4
    $region2: #{transformer_block.1} parent=1 // loop_pre_header
      _
    $region3: #{transformer_block.1} parent=1 // loop_header
      %s13 = sphi 0, %s17
      %p14 = scmp.ge.s32.totalorder %s13, 4
      %s23 = sphi 0, %s25
      %s26 = sphi 0, %s23
      %s27 = sphi 0, %s26
      %s43 = sphi 0, %s27
      %s47 = sphi 0, %s47
      %s49 = sphi 0, %s47
      %s50 = sphi 0, %s49
      %s64 = sphi 0, %s50
      %s68 = sphi 0, %s68
      %s70 = sphi 0, %s68
      %s71 = sphi 0, %s70
      %s85 = sphi 0, %s71
      %s89 = sphi 0, %s89
      %s91 = sphi 0, %s89
      %s92 = sphi 0, %s91
      %s106 = sphi 0, %s92
      %s112 = sphi 0, %s114
      %s115 = sphi 0, %s112
      %s116 = sphi 0, %s115
      %s132 = sphi 0, %s116
    $region4: #{transformer_block.1} parent=1 // loop_header_branch
      %16 = sbr.rel (%p14) target = $region8
    $region5: #{transformer_block.1} parent=1 // loop_body
      %s18 = ssub.s32 %s13, 1
      %s19 = ssub.s32 %s13, 2
      %s20 = sadd.s32 %s13, 1
      %s21 = ssub.s32 %s13, %s20
      %p22 = scmp.eq.s32.totalorder %s21, 0
      %s24 = sadd.s32 %s23, 1
      %s25 = scalar_select %p22, %s23, %s24
      %p28 = pneg %p22
      %p29 = scmp.eq.s32.totalorder %s13, 1
      %p30 = por %p28, %p29
      %p31 = scmp.ne.s32.totalorder %s23, %s26
      %p32 = scmp.eq.s32.totalorder %s13, 0
      %p33 = por %p31, %p32
      %p34 = scmp.ne.s32.totalorder %s23, %s26
      %p35 = scmp.eq.s32.totalorder %s18, 1
      %p36 = por %p34, %p35
      %p37 = scmp.ne.s32.totalorder %s26, %s27
      %p38 = scmp.eq.s32.totalorder %s18, 0
      %p39 = por %p37, %p38
      %p40 = scmp.ne.s32.totalorder %s26, %s27
      %p41 = scmp.eq.s32.totalorder %s19, 1
      %p42 = por %p40, %p41
      %p44 = scmp.ne.s32.totalorder %s27, %s43
      %p45 = scmp.eq.s32.totalorder %s19, 0
      %p46 = por %p44, %p45
      %s48 = sadd.s32 %s47, 1
      %p51 = scmp.eq.s32.totalorder %s13, 1
      %p52 = scmp.ne.s32.totalorder %s47, %s49
      %p53 = scmp.eq.s32.totalorder %s13, 0
      %p54 = por %p52, %p53
      %p55 = scmp.ne.s32.totalorder %s47, %s49
      %p56 = scmp.eq.s32.totalorder %s18, 1
      %p57 = por %p55, %p56
      %p58 = scmp.ne.s32.totalorder %s49, %s50
      %p59 = scmp.eq.s32.totalorder %s18, 0
      %p60 = por %p58, %p59
      %p61 = scmp.ne.s32.totalorder %s49, %s50
      %p62 = scmp.eq.s32.totalorder %s19, 1
      %p63 = por %p61, %p62
      %p65 = scmp.ne.s32.totalorder %s50, %s64
      %p66 = scmp.eq.s32.totalorder %s19, 0
      %p67 = por %p65, %p66
      %s69 = sadd.s32 %s68, 1
      %p72 = scmp.eq.s32.totalorder %s13, 1
      %p73 = scmp.ne.s32.totalorder %s68, %s70
      %p74 = scmp.eq.s32.totalorder %s13, 0
      %p75 = por %p73, %p74
      %p76 = scmp.ne.s32.totalorder %s68, %s70
      %p77 = scmp.eq.s32.totalorder %s18, 1
      %p78 = por %p76, %p77
      %p79 = scmp.ne.s32.totalorder %s70, %s71
      %p80 = scmp.eq.s32.totalorder %s18, 0
      %p81 = por %p79, %p80
      %p82 = scmp.ne.s32.totalorder %s70, %s71
      %p83 = scmp.eq.s32.totalorder %s19, 1
      %p84 = por %p82, %p83
      %p86 = scmp.ne.s32.totalorder %s71, %s85
      %p87 = scmp.eq.s32.totalorder %s19, 0
      %p88 = por %p86, %p87
      %s90 = sadd.s32 %s89, 1
      %p93 = scmp.eq.s32.totalorder %s13, 1
      %p94 = scmp.ne.s32.totalorder %s89, %s91
      %p95 = scmp.eq.s32.totalorder %s13, 0
      %p96 = por %p94, %p95
      %p97 = scmp.ne.s32.totalorder %s89, %s91
      %p98 = scmp.eq.s32.totalorder %s18, 1
      %p99 = por %p97, %p98
      %p100 = scmp.ne.s32.totalorder %s91, %s92
      %p101 = scmp.eq.s32.totalorder %s18, 0
      %p102 = por %p100, %p101
      %p103 = scmp.ne.s32.totalorder %s91, %s92
      %p104 = scmp.eq.s32.totalorder %s19, 1
      %p105 = por %p103, %p104
      %p107 = scmp.ne.s32.totalorder %s92, %s106
      %p108 = scmp.eq.s32.totalorder %s19, 0
      %p109 = por %p107, %p108
      %s110 = ssub.s32 %s13, %s20
      %p111 = scmp.eq.s32.totalorder %s110, 0
      %s113 = sadd.s32 %s112, 1
      %s114 = scalar_select %p111, %s112, %s113
      %p117 = pneg %p111
      %p118 = scmp.eq.s32.totalorder %s13, 1
      %p119 = por %p117, %p118
      %p120 = scmp.ne.s32.totalorder %s112, %s115
      %p121 = scmp.eq.s32.totalorder %s13, 0
      %p122 = por %p120, %p121
      %p123 = scmp.ne.s32.totalorder %s112, %s115
      %p124 = scmp.eq.s32.totalorder %s18, 1
      %p125 = por %p123, %p124
      %p126 = scmp.ne.s32.totalorder %s115, %s116
      %p127 = scmp.eq.s32.totalorder %s18, 0
      %p128 = por %p126, %p127
      %p129 = scmp.ne.s32.totalorder %s115, %s116
      %p130 = scmp.eq.s32.totalorder %s19, 1
      %p131 = por %p129, %p130
      %p133 = scmp.ne.s32.totalorder %s116, %s132
      %p134 = scmp.eq.s32.totalorder %s19, 0
      %p135 = por %p133, %p134
      %p136 = scmp.le.s32.totalorder 1, %s13
      %p137 = scmp.lt.s32.totalorder %s13, 3
      %p138 = pnand %p136, %p137
      %p139 = pneg %p138
      // Predicated region
      $region9: #{transformer_block.1} parent=5 // pred_check
        _
      $region10: #{transformer_block.1} parent=5 // pred_check_branch
        %141 = sbr.rel (%p138) target = $region12
      $region11: #{transformer_block.1} parent=5 // pred_region
        %s142 = ssub.s32 %s13, 1
        // Predicated region
        $region13: #{transformer_block.1} parent=11 // pred_check
          %p143 = pneg %p60
        $region14: #{transformer_block.1} parent=11 // pred_check_branch
          %145 = sbr.rel (%p143) target = $region16
        $region15: #{transformer_block.1} parent=11 // pred_region
          _
        $region16: #{transformer_block.1} parent=11 // pred_fallthru
          _
        // Predicated region
        $region17: #{transformer_block.1} parent=11 // pred_check
          %p146 = pneg %p81
        $region18: #{transformer_block.1} parent=11 // pred_check_branch
          %148 = sbr.rel (%p146) target = $region20
        $region19: #{transformer_block.1} parent=11 // pred_region
          _
        $region20: #{transformer_block.1} parent=11 // pred_fallthru
          _
        // Predicated region
        $region21: #{transformer_block.1} parent=11 // pred_check
          %p149 = pneg %p102
        $region22: #{transformer_block.1} parent=11 // pred_check_branch
          %151 = sbr.rel (%p149) target = $region24
        $region23: #{transformer_block.1} parent=11 // pred_region
          _
        $region24: #{transformer_block.1} parent=11 // pred_fallthru
          _
      $region12: #{transformer_block.1} parent=5 // pred_fallthru
        _
      %p152 = scmp.lt.s32.totalorder %s13, 2
      // Predicated region
      $region25: #{transformer_block.1} parent=5 // pred_check
        %p153 = pneg %p152
      $region26: #{transformer_block.1} parent=5 // pred_check_branch
        %155 = sbr.rel (%p153) target = $region28
      $region27: #{transformer_block.1} parent=5 // pred_region
        // Predicated region
        $region29: #{transformer_block.1} parent=27 // pred_check
          %p156 = pneg %p33
        $region30: #{transformer_block.1} parent=27 // pred_check_branch
          %158 = sbr.rel (%p156) target = $region32
        $region31: #{transformer_block.1} parent=27 // pred_region
          %p159 = scmp.lt.s32.totalorder %s13, 1
          %s160 = scalar_select %p159, %s13, 1
          %s161 = smul.addr %s160, 4
          %s162 = scalar_lea.vmem %s0, %s161
        $region32: #{transformer_block.1} parent=27 // pred_fallthru
          _
      $region28: #{transformer_block.1} parent=5 // pred_fallthru
        _
      %p163 = scmp.le.s32.totalorder 1, %s13
      %p164 = scmp.lt.s32.totalorder %s13, 3
      %p165 = pnand %p163, %p164
      %p166 = pneg %p165
      // Predicated region
      $region33: #{transformer_block.1} parent=5 // pred_check
        _
      $region34: #{transformer_block.1} parent=5 // pred_check_branch
        %168 = sbr.rel (%p165) target = $region36
      $region35: #{transformer_block.1} parent=5 // pred_region
        %s169 = ssub.s32 %s13, 1
        %p170 = scmp.lt.s32.totalorder %s18, 1
        %s171 = scalar_select %p170, %s18, 1
        %s172 = smul.addr %s171, 4
        %s173 = scalar_lea.vmem %s0, %s172
        %p174 = pneg %p39
        %p175 = pneg %p36
        %p176 = pneg %p60
        %p177 = pneg %p57
        %p178 = pneg %p81
        %p179 = pneg %p78
        %p180 = pneg %p102
        %p181 = pneg %p99
        %p182 = pneg %p128
        %p183 = pneg %p125
        %s184 = sand.u32 %s115, 1
        %s185 = scalar_lea.sflag [#allocation3], %s184
        %s186 = sand.u32 %s115, 1
        %s187 = smul.addr %s186, 4
        %s188 = scalar_lea.vmem [#allocation2], %s187
        %p189 = scmp.lt.s32.totalorder %s18, 1
        %s190 = scalar_select %p189, %s18, 1
        %s191 = smul.addr %s190, 4
        %s192 = scalar_lea.vmem %s0, %s191
        %v194 = vld [vmem:[%s192] sm:$0xf]
        %v195 = vld [vmem:[%s1] sm:$0xff]
        %v196 = vld [vmem:[%s1 + $0x8] sm:$0x1]
        %v197 = vld [vmem:[%s1 + $0x9] sm:$0x1]
        %v198 = vunpack.c.l.bf16 %v194
        %v199 = vmul.f32 %v198, %v198
        %vm200 = vcmask 261120
        %v201 = vsel %vm200, %v199, 0.0
        %202 = vadd.xlane.f32.xlu0 %v201
        %v203 = vpop.xlane.xlu0 %202
        %v204 = vrcp.pop 32.0
        %v205 = vmul.f32 32.0, %v204
        %v206 = vsub.f32 1.0, %v205
        %v207 = vmul.f32 %v204, %v206
        %v208 = vadd.f32 %v204, %v207
        %vm209 = vweird.f32 %v204
        %v210 = vsel %vm209, %v204, %v208
        %v211 = vmul.f32 %v203, %v210
        %v212 = vadd.f32 %v211, 1e-05
        %v213 = vrsqrt.pop %v212
        %v214 = vmul.f32 %v213, %v212
        %v215 = vmul.f32 %v214, %v213
        %v216 = vmul.f32 0.5, %v215
        %v217 = vsub.f32 1.5, %v216
        %v218 = vmul.f32 %v213, %v217
        %vm219 = vweird.f32 %v212
        %vm220 = vweird.f32 %v213
        %vm221 = vmor %vm219, %vm220
        %v222 = vsel %vm221, %v213, %v218
        %v223 = vmul.f32 %v198, %v222
        %v224 = vperm.slane %v196, 0
        %v225 = vmul.f32 %v223, %v224
        %v226 = vpack.c.bf16 %v225, %v225
        %v227 = vld [vmem:[%s2] sm:$0xf]
        %v228 = vld [vmem:[%s2 + $0x8] sm:$0xf]
        %v229 = vld [vmem:[%s2 + $0x10] sm:$0xf]
        %v230 = vld [vmem:[%s2 + $0x18] sm:$0xf]
        %v235 = vunpack.c.l.b16 %v227
        %v236 = vunpack.c.l.b16 %v228
        %v237 = vunpack.c.l.b16 %v229
        %v238 = vunpack.c.l.b16 %v230
        %v239 = vpack.c.b16 %v236, %v235
        %v240 = vpack.c.b16 %v238, %v237
        %v244 = vsel %vm200, %v226, 0
        %246 = vmatpush.bf16.msra.mxu0 0
        %247 = vmatpush.bf16.msra.mxu0 0
        %248 = vmatpush.bf16.msra.mxu0 0
        %249 = vmatpush.bf16.msra.mxu0 0
        %250 = vmatpush.bf16.msra.mxu0 0
        %251 = vmatpush.bf16.msra.mxu0 0
        %252 = vmatpush.bf16.msra.mxu0 %v240
        %253 = vmatpush.bf16.msra.mxu0 %v239
        %254 = vmatmul.bf16.gmra.mxu0 %v244
        %v255 = vpop.f32.mrf.mxu0
        %v256 = vadd.f32 0.0, %v255
        %v257 = vpop.f32.mrf.mxu0
        %258 = vdwg.mxu0
        %v259 = vmul.f32 %v256, %v195
        %261 = vrot.lane.b32.xlu0 %v195, 32
        %v262 = vpop.permute.xlu0 %261
        %v264 = vmul.f32 %v256, %v262
        %266 = vrot.lane.b32.xlu0 %v264, 64
        %v267 = vpop.permute.xlu0 %266
        %v269 = vadd.f32 %v259, %v267
        %v270 = vpack.c.bf16 %v269, %v269
        %271 = vrot.lane.b32.xlu0 %v195, 96
        %v272 = vpop.permute.xlu0 %271
        %v274 = vmul.f32 %v256, %v272
        %275 = vrot.lane.b32.xlu0 %v195, 16
        %v276 = vpop.permute.xlu0 %275
        %v278 = vmul.f32 %v256, %v276
        %280 = vrot.lane.b32.xlu0 %v278, 64
        %v281 = vpop.permute.xlu0 %280
        %v283 = vadd.f32 %v274, %v281
        %v284 = vpack.c.bf16 %v283, %v283
        %v285 = vpack.c.bf16 %v256, %v256
        %v287 = vunpack.c.l.b16 %v284
        %v288 = vpack.c.b16 %v287, %v287
        %289 = vrot.lane.b32.xlu0 %v288, 96
        %v290 = vpop.permute.xlu0 %289
        %vm291 = vcmask 64512
        %v293 = vsel %vm291, %v270, 0
        %v296 = vsel %vm291, %v290, 0
        %298 = vmatpush.bf16.xpose.msra.mxu0 0
        %299 = vmatpush.bf16.xpose.msra.mxu0 0
        %300 = vmatpush.bf16.xpose.msra.mxu0 0
        %301 = vmatpush.bf16.xpose.msra.mxu0 0
        %302 = vmatpush.bf16.xpose.msra.mxu0 0
        %303 = vmatpush.bf16.xpose.msra.mxu0 0
        %304 = vmatpush.bf16.xpose.msra.mxu0 0
        %305 = vmatpush.bf16.xpose.msra.mxu0 %v296
        %306 = vmatmul.bf16.gmra.mxu0 %v293
        %v307 = vpop.f32.mrf.mxu0
        %v308 = vadd.f32 0.0, %v307
        %v309 = vpop.f32.mrf.mxu0
        %310 = vdwg.mxu0
        %v311 = vmul.f32 %v308, 0.35355338
        %v312 = vadd.f32 %v311, %v262
        %v313 = vsel %vm291, %v312, -inf
        %314 = vmax.xlane.f32.xlu0 %v313
        %v315 = vpop.xlane.xlu0 %314
        %v316 = vsub.f32 %v312, %v315
        %v317 = vmul.f32 %v316, 1.442695
        %v318 = vpow.pop %v317
        %v319 = vsel %vm291, %v318, 0.0
        %320 = vadd.xlane.f32.xlu0 %v319
        %v321 = vpop.xlane.xlu0 %320
        %v322 = vrcp.pop %v321
        %v323 = vmul.f32 %v321, %v322
        %v324 = vsub.f32 1.0, %v323
        %v325 = vmul.f32 %v322, %v324
        %v326 = vadd.f32 %v322, %v325
        %vm327 = vweird.f32 %v321
        %vm328 = vweird.f32 %v322
        %vm329 = vmor %vm327, %vm328
        %v330 = vsel %vm329, %v322, %v326
        %v331 = vand.u32 2147483647, %v321
        %vm332 = vcmp.eq.f32.partialorder %v331, 8.507059e+37
        %v333 = vand.u32 %v321, 2147483648
        %v334 = vor.u32 1.1754944e-38, %v333
        %v335 = vsel %vm332, %v334, %v330
        %v336 = vmul.f32 %v318, %v335
        %v337 = vpack.c.bf16 %v336, %v336
        %v339 = vunpack.c.l.b16 %v285
        %v340 = vpack.c.b16 %v339, %v339
        %341 = vrot.lane.b32.xlu0 %v340, 80
        %v342 = vpop.permute.xlu0 %341
        %v344 = vsel %vm291, %v337, 0
        %vm346 = vcmask 1043456
        %v348 = vsel %vm346, %v342, 0
        %350 = vmatpush.bf16.msra.mxu0 0
        %351 = vmatpush.bf16.msra.mxu0 0
        %352 = vmatpush.bf16.msra.mxu0 0
        %353 = vmatpush.bf16.msra.mxu0 0
        %354 = vmatpush.bf16.msra.mxu0 0
        %355 = vmatpush.bf16.msra.mxu0 0
        %356 = vmatpush.bf16.msra.mxu0 0
        %357 = vmatpush.bf16.msra.mxu0 %v348
        %358 = vmatmul.bf16.gmra.mxu0 %v344
        %v359 = vpop.f32.mrf.mxu0
        %v360 = vadd.f32 0.0, %v359
        %v361 = vpop.f32.mrf.mxu0
        %362 = vdwg.mxu0
        %v364 = vunpack.c.l.b16 %v270
        %v365 = vpack.c.b16 %v364, %v364
        %366 = vrot.lane.b32.xlu0 %v365, 120
        %v367 = vpop.permute.xlu0 %366
        %v369 = vsel %vm291, %v367, 0
        %371 = vmatpush.bf16.xpose.msra.mxu0 0
        %372 = vmatpush.bf16.xpose.msra.mxu0 0
        %373 = vmatpush.bf16.xpose.msra.mxu0 0
        %374 = vmatpush.bf16.xpose.msra.mxu0 0
        %375 = vmatpush.bf16.xpose.msra.mxu0 0
        %376 = vmatpush.bf16.xpose.msra.mxu0 0
        %377 = vmatpush.bf16.xpose.msra.mxu0 0
        %378 = vmatpush.bf16.xpose.msra.mxu0 %v296
        %379 = vmatmul.bf16.gmra.mxu0 %v369
        %v380 = vpop.f32.mrf.mxu0
        %v381 = vadd.f32 0.0, %v380
        %v382 = vpop.f32.mrf.mxu0
        %383 = vdwg.mxu0
        %v384 = vmul.f32 %v381, 0.35355338
        %v385 = vadd.f32 %v384, %v262
        %v386 = vsel %vm291, %v385, -inf
        %387 = vmax.xlane.f32.xlu0 %v386
        %v388 = vpop.xlane.xlu0 %387
        %v389 = vsub.f32 %v385, %v388
        %v390 = vmul.f32 %v389, 1.442695
        %v391 = vpow.pop %v390
        %v392 = vsel %vm291, %v391, 0.0
        %393 = vadd.xlane.f32.xlu0 %v392
        %v394 = vpop.xlane.xlu0 %393
        %v395 = vrcp.pop %v394
        %v396 = vmul.f32 %v394, %v395
        %v397 = vsub.f32 1.0, %v396
        %v398 = vmul.f32 %v395, %v397
        %v399 = vadd.f32 %v395, %v398
        %vm400 = vweird.f32 %v394
        %vm401 = vweird.f32 %v395
        %vm402 = vmor %vm400, %vm401
        %v403 = vsel %vm402, %v395, %v399
        %v404 = vand.u32 2147483647, %v394
        %vm405 = vcmp.eq.f32.partialorder %v404, 8.507059e+37
        %v406 = vand.u32 %v394, 2147483648
        %v407 = vor.u32 1.1754944e-38, %v406
        %v408 = vsel %vm405, %v407, %v403
        %v409 = vmul.f32 %v391, %v408
        %v410 = vpack.c.bf16 %v409, %v409
        %v412 = vsel %vm291, %v410, 0
        %414 = vmatpush.bf16.msra.mxu0 0
        %415 = vmatpush.bf16.msra.mxu0 0
        %416 = vmatpush.bf16.msra.mxu0 0
        %417 = vmatpush.bf16.msra.mxu0 0
        %418 = vmatpush.bf16.msra.mxu0 0
        %419 = vmatpush.bf16.msra.mxu0 0
        %420 = vmatpush.bf16.msra.mxu0 0
        %421 = vmatpush.bf16.msra.mxu0 %v348
        %422 = vmatmul.bf16.gmra.mxu0 %v412
        %v423 = vpop.f32.mrf.mxu0
        %v424 = vadd.f32 0.0, %v423
        %v425 = vpop.f32.mrf.mxu0
        %426 = vdwg.mxu0
        %427 = vrot.lane.b32.xlu0 %v365, 112
        %v428 = vpop.permute.xlu0 %427
        %429 = vrot.lane.b32.xlu0 %v288, 88
        %v430 = vpop.permute.xlu0 %429
        %v432 = vsel %vm291, %v428, 0
        %v435 = vsel %vm291, %v430, 0
        %437 = vmatpush.bf16.xpose.msra.mxu0 0
        %438 = vmatpush.bf16.xpose.msra.mxu0 0
        %439 = vmatpush.bf16.xpose.msra.mxu0 0
        %440 = vmatpush.bf16.xpose.msra.mxu0 0
        %441 = vmatpush.bf16.xpose.msra.mxu0 0
        %442 = vmatpush.bf16.xpose.msra.mxu0 0
        %443 = vmatpush.bf16.xpose.msra.mxu0 0
        %444 = vmatpush.bf16.xpose.msra.mxu0 %v435
        %445 = vmatmul.bf16.gmra.mxu0 %v432
        %v446 = vpop.f32.mrf.mxu0
        %v447 = vadd.f32 0.0, %v446
        %v448 = vpop.f32.mrf.mxu0
        %449 = vdwg.mxu0
        %v450 = vmul.f32 %v447, 0.35355338
        %v451 = vadd.f32 %v450, %v262
        %v452 = vsel %vm291, %v451, -inf
        %453 = vmax.xlane.f32.xlu0 %v452
        %v454 = vpop.xlane.xlu0 %453
        %v455 = vsub.f32 %v451, %v454
        %v456 = vmul.f32 %v455, 1.442695
        %v457 = vpow.pop %v456
        %v458 = vsel %vm291, %v457, 0.0
        %459 = vadd.xlane.f32.xlu0 %v458
        %v460 = vpop.xlane.xlu0 %459
        %v461 = vrcp.pop %v460
        %v462 = vmul.f32 %v460, %v461
        %v463 = vsub.f32 1.0, %v462
        %v464 = vmul.f32 %v461, %v463
        %v465 = vadd.f32 %v461, %v464
        %vm466 = vweird.f32 %v460
        %vm467 = vweird.f32 %v461
        %vm468 = vmor %vm466, %vm467
        %v469 = vsel %vm468, %v461, %v465
        %v470 = vand.u32 2147483647, %v460
        %vm471 = vcmp.eq.f32.partialorder %v470, 8.507059e+37
        %v472 = vand.u32 %v460, 2147483648
        %v473 = vor.u32 1.1754944e-38, %v472
        %v474 = vsel %vm471, %v473, %v469
        %v475 = vmul.f32 %v457, %v474
        %v476 = vpack.c.bf16 %v475, %v475
        %477 = vrot.lane.b32.xlu0 %v340, 72
        %v478 = vpop.permute.xlu0 %477
        %v480 = vsel %vm291, %v476, 0
        %v483 = vsel %vm346, %v478, 0
        %485 = vmatpush.bf16.msra.mxu0 0
        %486 = vmatpush.bf16.msra.mxu0 0
        %487 = vmatpush.bf16.msra.mxu0 0
        %488 = vmatpush.bf16.msra.mxu0 0
        %489 = vmatpush.bf16.msra.mxu0 0
        %490 = vmatpush.bf16.msra.mxu0 0
        %491 = vmatpush.bf16.msra.mxu0 0
        %492 = vmatpush.bf16.msra.mxu0 %v483
        %493 = vmatmul.bf16.gmra.mxu0 %v480
        %v494 = vpop.f32.mrf.mxu0
        %v495 = vadd.f32 0.0, %v494
        %v496 = vpop.f32.mrf.mxu0
        %497 = vdwg.mxu0
        %498 = vrot.lane.b32.xlu0 %v365, 104
        %v499 = vpop.permute.xlu0 %498
        %v501 = vsel %vm291, %v499, 0
        %503 = vmatpush.bf16.xpose.msra.mxu0 0
        %504 = vmatpush.bf16.xpose.msra.mxu0 0
        %505 = vmatpush.bf16.xpose.msra.mxu0 0
        %506 = vmatpush.bf16.xpose.msra.mxu0 0
        %507 = vmatpush.bf16.xpose.msra.mxu0 0
        %508 = vmatpush.bf16.xpose.msra.mxu0 0
        %509 = vmatpush.bf16.xpose.msra.mxu0 0
        %510 = vmatpush.bf16.xpose.msra.mxu0 %v435
        %511 = vmatmul.bf16.gmra.mxu0 %v501
        %v512 = vpop.f32.mrf.mxu0
        %v513 = vadd.f32 0.0, %v512
        %v514 = vpop.f32.mrf.mxu0
        %515 = vdwg.mxu0
        %v516 = vmul.f32 %v513, 0.35355338
        %v517 = vadd.f32 %v516, %v262
        %v518 = vsel %vm291, %v517, -inf
        %519 = vmax.xlane.f32.xlu0 %v518
        %v520 = vpop.xlane.xlu0 %519
        %v521 = vsub.f32 %v517, %v520
        %v522 = vmul.f32 %v521, 1.442695
        %v523 = vpow.pop %v522
        %v524 = vsel %vm291, %v523, 0.0
        %525 = vadd.xlane.f32.xlu0 %v524
        %v526 = vpop.xlane.xlu0 %525
        %v527 = vrcp.pop %v526
        %v528 = vmul.f32 %v526, %v527
        %v529 = vsub.f32 1.0, %v528
        %v530 = vmul.f32 %v527, %v529
        %v531 = vadd.f32 %v527, %v530
        %vm532 = vweird.f32 %v526
        %vm533 = vweird.f32 %v527
        %vm534 = vmor %vm532, %vm533
        %v535 = vsel %vm534, %v527, %v531
        %v536 = vand.u32 2147483647, %v526
        %vm537 = vcmp.eq.f32.partialorder %v536, 8.507059e+37
        %v538 = vand.u32 %v526, 2147483648
        %v539 = vor.u32 1.1754944e-38, %v538
        %v540 = vsel %vm537, %v539, %v535
        %v541 = vmul.f32 %v523, %v540
        %v542 = vpack.c.bf16 %v541, %v541
        %v544 = vsel %vm291, %v542, 0
        %546 = vmatpush.bf16.msra.mxu0 0
        %547 = vmatpush.bf16.msra.mxu0 0
        %548 = vmatpush.bf16.msra.mxu0 0
        %549 = vmatpush.bf16.msra.mxu0 0
        %550 = vmatpush.bf16.msra.mxu0 0
        %551 = vmatpush.bf16.msra.mxu0 0
        %552 = vmatpush.bf16.msra.mxu0 0
        %553 = vmatpush.bf16.msra.mxu0 %v483
        %554 = vmatmul.bf16.gmra.mxu0 %v544
        %v555 = vpop.f32.mrf.mxu0
        %v556 = vadd.f32 0.0, %v555
        %v557 = vpop.f32.mrf.mxu0
        %558 = vdwg.mxu0
        %560 = vrot.lane.b32.xlu0 %v424, 8
        %v561 = vpop.permute.xlu0 %560
        %564 = vrot.lane.b32.xlu0 %v495, 16
        %v565 = vpop.permute.xlu0 %564
        %568 = vrot.lane.b32.xlu0 %v556, 24
        %v569 = vpop.permute.xlu0 %568
        %v571 = vsel %vm291, %v360, %v561
        %vm572 = vcmask 130048
        %v573 = vsel %vm572, %v571, %v565
        %vm574 = vcmask 195584
        %v575 = vsel %vm574, %v573, %v569
        %v576 = vpack.c.bf16 %v575, %v575
        %v577 = vld [vmem:[%s3] sm:$0xf]
        %v578 = vld [vmem:[%s3 + $0x4] sm:$0xf]
        %v579 = vld [vmem:[%s3 + $0x8] sm:$0xf]
        %v580 = vld [vmem:[%s3 + $0xc] sm:$0xf]
        %v585 = vunpack.c.l.b16 %v577
        %v586 = vunpack.c.l.b16 %v578
        %v587 = vunpack.c.l.b16 %v579
        %v588 = vunpack.c.l.b16 %v580
        %v589 = vpack.c.b16 %v586, %v585
        %v590 = vpack.c.b16 %v588, %v587
        %v594 = vsel %vm200, %v576, 0
        %596 = vmatpush.bf16.msra.mxu0 0
        %597 = vmatpush.bf16.msra.mxu0 0
        %598 = vmatpush.bf16.msra.mxu0 0
        %599 = vmatpush.bf16.msra.mxu0 0
        %600 = vmatpush.bf16.msra.mxu0 0
        %601 = vmatpush.bf16.msra.mxu0 0
        %602 = vmatpush.bf16.msra.mxu0 %v590
        %603 = vmatpush.bf16.msra.mxu0 %v589
        %604 = vmatmul.bf16.gmra.mxu0 %v594
        %v605 = vpop.f32.mrf.mxu0
        %v606 = vadd.f32 0.0, %v605
        %v607 = vpop.f32.mrf.mxu0
        %608 = vdwg.mxu0
        %v609 = vpack.c.bf16 %v606, %v606
        %v610 = vunpack.c.l.bf16 %v609
        %v611 = vadd.f32 %v198, %v610
        %v612 = vpack.c.bf16 %v611, %v611
        %v613 = vunpack.c.l.bf16 %v612
        %v614 = vmul.f32 %v613, %v613
        %v615 = vsel %vm200, %v614, 0.0
        %616 = vadd.xlane.f32.xlu0 %v615
        %v617 = vpop.xlane.xlu0 %616
        %v618 = vmul.f32 %v617, %v210
        %v619 = vadd.f32 %v618, 1e-05
        %v620 = vrsqrt.pop %v619
        %v621 = vmul.f32 %v620, %v619
        %v622 = vmul.f32 %v621, %v620
        %v623 = vmul.f32 0.5, %v622
        %v624 = vsub.f32 1.5, %v623
        %v625 = vmul.f32 %v620, %v624
        %vm626 = vweird.f32 %v619
        %vm627 = vweird.f32 %v620
        %vm628 = vmor %vm626, %vm627
        %v629 = vsel %vm628, %v620, %v625
        %v630 = vmul.f32 %v613, %v629
        %v631 = vperm.slane %v197, 0
        %v632 = vmul.f32 %v630, %v631
        %v633 = vpack.c.bf16 %v632, %v632
        %v634 = vld [vmem:[%s2 + $0x4] sm:$0xf]
        %v635 = vld [vmem:[%s2 + $0xc] sm:$0xf]
        %v636 = vld [vmem:[%s2 + $0x14] sm:$0xf]
        %v637 = vld [vmem:[%s2 + $0x1c] sm:$0xf]
        %v642 = vunpack.c.l.b16 %v634
        %v643 = vunpack.c.l.b16 %v635
        %v644 = vunpack.c.l.b16 %v636
        %v645 = vunpack.c.l.b16 %v637
        %v646 = vpack.c.b16 %v643, %v642
        %v647 = vpack.c.b16 %v645, %v644
        %v651 = vsel %vm200, %v633, 0
        %653 = vmatpush.bf16.msra.mxu0 0
        %654 = vmatpush.bf16.msra.mxu0 0
        %655 = vmatpush.bf16.msra.mxu0 0
        %656 = vmatpush.bf16.msra.mxu0 0
        %657 = vmatpush.bf16.msra.mxu0 0
        %658 = vmatpush.bf16.msra.mxu0 0
        %659 = vmatpush.bf16.msra.mxu0 %v647
        %660 = vmatpush.bf16.msra.mxu0 %v646
        %661 = vmatmul.bf16.gmra.mxu0 %v651
        %v662 = vpop.f32.mrf.mxu0
        %v663 = vadd.f32 0.0, %v662
        %v664 = vpop.f32.mrf.mxu0
        %665 = vdwg.mxu0
        %v666 = vxor.u32 %v663, 2147483648
        %v667 = vmul.f32 %v666, 1.442695
        %v668 = vpow.pop %v667
        %v669 = vadd.f32 %v668, 1.0
        %v670 = vrcp.pop %v669
        %v671 = vmul.f32 %v669, %v670
        %v672 = vsub.f32 1.0, %v671
        %v673 = vmul.f32 %v670, %v672
        %v674 = vadd.f32 %v670, %v673
        %vm675 = vweird.f32 %v669
        %vm676 = vweird.f32 %v670
        %vm677 = vmor %vm675, %vm676
        %v678 = vsel %vm677, %v670, %v674
        %v679 = vand.u32 2147483647, %v669
        %vm680 = vcmp.eq.f32.partialorder %v679, 8.507059e+37
        %v681 = vand.u32 %v669, 2147483648
        %v682 = vor.u32 1.1754944e-38, %v681
        %v683 = vsel %vm680, %v682, %v678
        %v684 = vmul.f32 1.0, %v683
        %v685 = vmul.f32 %v663, %v684
        %687 = vrot.lane.b32.xlu0 %v663, 64
        %v688 = vpop.permute.xlu0 %687
        %v690 = vmul.f32 %v685, %v688
        %v691 = vpack.c.bf16 %v690, %v690
        %v692 = vld [vmem:[%s3 + $0x10] sm:$0xf]
        %v693 = vld [vmem:[%s3 + $0x14] sm:$0xf]
        %v694 = vld [vmem:[%s3 + $0x18] sm:$0xf]
        %v695 = vld [vmem:[%s3 + $0x1c] sm:$0xf]
        %v696 = vld [vmem:[%s3 + $0x20] sm:$0xf]
        %v697 = vld [vmem:[%s3 + $0x24] sm:$0xf]
        %v698 = vld [vmem:[%s3 + $0x28] sm:$0xf]
        %v699 = vld [vmem:[%s3 + $0x2c] sm:$0xf]
        %v708 = vunpack.c.l.b16 %v692
        %v709 = vunpack.c.l.b16 %v693
        %v710 = vunpack.c.l.b16 %v694
        %v711 = vunpack.c.l.b16 %v695
        %v712 = vunpack.c.l.b16 %v696
        %v713 = vunpack.c.l.b16 %v697
        %v714 = vunpack.c.l.b16 %v698
        %v715 = vunpack.c.l.b16 %v699
        %v716 = vpack.c.b16 %v709, %v708
        %v717 = vpack.c.b16 %v711, %v710
        %v718 = vpack.c.b16 %v713, %v712
        %v719 = vpack.c.b16 %v715, %v714
        %vm724 = vcmask 523264
        %v726 = vsel %vm724, %v691, 0
        %728 = vmatpush.bf16.msra.mxu0 0
        %729 = vmatpush.bf16.msra.mxu0 0
        %730 = vmatpush.bf16.msra.mxu0 0
        %731 = vmatpush.bf16.msra.mxu0 0
        %732 = vmatpush.bf16.msra.mxu0 %v719
        %733 = vmatpush.bf16.msra.mxu0 %v718
        %734 = vmatpush.bf16.msra.mxu0 %v717
        %735 = vmatpush.bf16.msra.mxu0 %v716
        %736 = vmatmul.bf16.gmra.mxu0 %v726
        %v737 = vpop.f32.mrf.mxu0
        %v738 = vadd.f32 0.0, %v737
        %v739 = vpop.f32.mrf.mxu0
        %740 = vdwg.mxu0
        %v741 = vpack.c.bf16 %v738, %v738
        %v742 = vunpack.c.l.bf16 %v741
        %v743 = vadd.f32 %v613, %v742
        %v744 = vpack.c.bf16 %v743, %v743
        %vm745 = vcmask 257024
        %746 = vst.msk [vmem:[%s188] sm:$0xf] %vm745, %v744
        %s747 = sand.u32 %s115, 1
        %s748 = scalar_lea.sflag [#allocation3], %s747
        %s749 = sand.u32 %s115, 1
        %s750 = smul.addr %s749, 4
        %s751 = scalar_lea.vmem [#allocation2], %s750
        // Predicated region
        $region37: #{transformer_block.1} parent=35 // pred_check
          %p752 = pneg %p125
        $region38: #{transformer_block.1} parent=35 // pred_check_branch
          %754 = sbr.rel (%p752) target = $region40
        $region39: #{transformer_block.1} parent=35 // pred_region
          %756 = vsyncadd %s748, 0
          %s757 = smul.addr %s18, 4
          %s758 = scalar_lea.hbm %s4, %s757
          %s760 = sshll.u32 %s751, 4
          %s761 = int_to_ptr.vmem [resolvable:$true] %s760
          %s762 = sshll.u32 %s758, 4
          %s763 = int_to_ptr.hbm [resolvable:$true] %s762
          %765 = dma.vmem_to_hbm [thread:$0]  %s761, 64, %s763, %s748
        $region40: #{transformer_block.1} parent=35 // pred_fallthru
          _
      $region36: #{transformer_block.1} parent=5 // pred_fallthru
        _
      %p766 = scmp.le.s32.totalorder 2, %s13
      // Predicated region
      $region41: #{transformer_block.1} parent=5 // pred_check
        %p767 = pneg %p766
      $region42: #{transformer_block.1} parent=5 // pred_check_branch
        %769 = sbr.rel (%p767) target = $region44
      $region43: #{transformer_block.1} parent=5 // pred_region
        %s770 = ssub.s32 %s13, 2
        // Predicated region
        $region45: #{transformer_block.1} parent=43 // pred_check
          %p771 = pneg %p131
        $region46: #{transformer_block.1} parent=43 // pred_check_branch
          %773 = sbr.rel (%p771) target = $region48
        $region47: #{transformer_block.1} parent=43 // pred_region
          %s774 = sand.u32 %s116, 1
          %s775 = scalar_lea.sflag [#allocation3], %s774
          %s776 = sand.u32 %s116, 1
          %s777 = smul.addr %s776, 4
          %s778 = scalar_lea.vmem [#allocation2], %s777
          %780 = dma.done %s775, 64
        $region48: #{transformer_block.1} parent=43 // pred_fallthru
          _
      $region44: #{transformer_block.1} parent=5 // pred_fallthru
        _
    $region6: #{transformer_block.1} parent=1 // loop_footer
      %s17 = sadd.s32 1, %s13
    $region7: #{transformer_block.1} parent=1 // loop_footer_branch
      %12 = sbr.rel target = $region3
    $region8: #{transformer_block.1} parent=1 // loop_exit
      _
    %781 = vsyncpa [#allocation3], 1
    %s782 = scalar_lea.sflag [#allocation3], 1
    %783 = vsyncpa %s782, 1

</llo_original>
